<compile_context>
chip_gen: v5e
topology: v5e:2x2
jax: 0.10.0
libtpu: 0.0.40
codegen_flags: <defaults>
</compile_context>

<pallas_src>
import functools

import jax
import jax.numpy as jnp
from jax.experimental import pallas as pl
from jax.experimental.pallas import tpu as pltpu


def shortnet_kernel(x_ref, p_ref, o_ref):
    H = (p_ref.shape[0] - 1) // 2
    x = x_ref[...]                                  # (2, TB) f32, batch on lanes
    p = p_ref[...]                                  # (2H+1, H+3) packed slab

    w2h   = p[0:H, 0:H]                             # (H, H)    layer-2 weights on h1
    w3h2  = p[H:H + 1, 0:H]                         # (1, H)    layer-3 weights on h2
    w3h1  = p[H + 1:H + 2, 0:H]                     # (1, H)    layer-3 weights on h1
    w_pre = p[:, H:H + 2]                           # (2H+1, 2) all weights acting on x
    b_pre = p[:, H + 2:H + 3]                       # (2H+1, 1) all biases

    # Every x-dependent (K=2) term + every bias in one MXU dot + one broadcast
    # add (the MXU has huge slack next to the HxH contraction):
    #   rows [0,H)   -> layer-1 pre-activation
    #   rows [H,2H)  -> layer-2 x-skip contribution (W2[:,H:] @ x + b2)
    #   row  2H      -> layer-3 x-skip contribution (W3[:,2H:] @ x + b3)
    pre = jnp.dot(w_pre, x, preferred_element_type=jnp.float32) + b_pre

    h1 = jnp.tanh(pre[0:H, :])                                           # (H, TB)
    h2 = jnp.tanh(jnp.dot(w2h, h1, preferred_element_type=jnp.float32)
                  + pre[H:2 * H, :])                                      # (H, TB)
    # layer 3 on cat([h2, h1, x]): two M=1 MXU dots + the precomputed x row.
    z3 = (jnp.dot(w3h2, h2, preferred_element_type=jnp.float32)
          + jnp.dot(w3h1, h1, preferred_element_type=jnp.float32)
          + pre[2 * H:2 * H + 1, :])                                      # (1, TB)

    o_ref[...] = jax.nn.sigmoid(z3).astype(o_ref.dtype)


def _pack_params(params):
    """Pack all weights/biases (PyTorch (out,in) convention) into one slab."""
    w1, b1, w2, b2, w3, b3 = params
    H = w1.shape[0]
    f32 = jnp.float32
    slab = jnp.zeros((2 * H + 1, H + 3), f32)
    slab = slab.at[0:H, 0:H].set(w2[:, :H].astype(f32))
    slab = slab.at[H, 0:H].set(w3[0, 0:H].astype(f32))
    slab = slab.at[H + 1, 0:H].set(w3[0, H:2 * H].astype(f32))
    slab = slab.at[0:H, H:H + 2].set(w1.astype(f32))
    slab = slab.at[0:H, H + 2].set(b1.astype(f32))
    slab = slab.at[H:2 * H, H:H + 2].set(w2[:, H:H + 2].astype(f32))
    slab = slab.at[H:2 * H, H + 2].set(b2.astype(f32))
    slab = slab.at[2 * H, H:H + 2].set(w3[0, 2 * H:2 * H + 2].astype(f32))
    slab = slab.at[2 * H, H + 2].set(b3[0].astype(f32))
    return slab                                      # (2H+1, H+3)


def _vmem_limit_bytes():
    """Generation-aware VMEM ceiling: 3/4 of physical, capped at 96 MiB."""
    cap = 64 * 1024 * 1024                           # conservative fallback (v7x)
    try:
        info = pltpu.get_tpu_info()
        cap = int(getattr(info, "vmem_capacity_bytes", cap))
    except Exception:
        pass
    return min((cap * 3) // 4, 96 * 1024 * 1024)     # 48 MiB v7x / 96 MiB v5e,v6e


def _tile_batch(B, tile_b):
    """128-aligned batch tile, evened across >=2 grid steps when B allows."""
    tb_cap = max(128, (int(tile_b) // 128) * 128)    # force multiple of 128
    b128 = ((B + 127) // 128) * 128
    ntiles = max(1, -(-b128 // tb_cap))
    if b128 > 128:
        ntiles = max(ntiles, 2)                      # >=2 steps: both TCs on v7x
    tb = -(-b128 // ntiles)
    tb = ((tb + 127) // 128) * 128                   # lane-aligned
    return tb, ntiles * tb                           # (tile, padded batch)


@functools.partial(jax.jit, static_argnames=("tile_b",))
def shortnet_forward(x, params, *, tile_b=16384):
    """x: (B, 2) float32 -> (B, 1) float32.  Matches ShortNet.forward."""
    slab = _pack_params(params)
    B = x.shape[0]
    tb, Bp = _tile_batch(B, tile_b)

    # TODO(synk): accept a feature-major (2, B) input upstream to drop this
    # (jit-fused) transpose/pad pass entirely.
    xt = jnp.pad(x.astype(jnp.float32).T, ((0, 0), (0, Bp - B)))   # (2, Bp)

    out = pl.pallas_call(
        shortnet_kernel,
        out_shape=jax.ShapeDtypeStruct((1, Bp), jnp.float32),
        grid=(Bp // tb,),
        in_specs=[
            pl.BlockSpec((2, tb), lambda i: (0, i)),        # activations tile
            pl.BlockSpec(slab.shape, lambda i: (0, 0)),     # weights: resident
        ],
        out_specs=pl.BlockSpec((1, tb), lambda i: (0, i)),  # lane-dense output
        compiler_params=pltpu.CompilerParams(
            dimension_semantics=("parallel",),              # 2 TCs on v7x
            vmem_limit_bytes=_vmem_limit_bytes(),
        ),
    )(xt, slab)
    return out[0, :B].reshape(B, 1)


def init_params(key, num_hid):
    """nn.Linear-style init; weights stored PyTorch-style as (out, in)."""
    dims = [(num_hid, 2), (num_hid, num_hid + 2), (1, 2 * num_hid + 2)]
    params = []
    for (fan_out, fan_in) in dims:
        key, kw, kb = jax.random.split(key, 3)
        bound = 1.0 / (fan_in ** 0.5)
        w = jax.random.uniform(kw, (fan_out, fan_in), jnp.float32, -bound, bound)
        b = jax.random.uniform(kb, (fan_out,), jnp.float32, -bound, bound)
        params.extend([w, b])
    return tuple(params)


def shortnet_reference(x, params):
    w1, b1, w2, b2, w3, b3 = params
    h1 = jnp.tanh(x @ w1.T + b1)
    t1 = jnp.concatenate([h1, x], axis=1)
    h2 = jnp.tanh(t1 @ w2.T + b2)
    t2 = jnp.concatenate([h2, h1, x], axis=1)
    return jax.nn.sigmoid(t2 @ w3.T + b3)


if __name__ == "__main__":
    num_hid = 32
    key = jax.random.PRNGKey(0)
    key, kx1, kx2, kx3 = jax.random.split(key, 4)
    params = init_params(key, num_hid)

    # Small shape consistent with the module's forward.
    x_small = jax.random.normal(kx1, (8, 2), dtype=jnp.float32)
    out_small = jax.block_until_ready(shortnet_forward(x_small, params))
    ref_small = shortnet_reference(x_small, params)
    assert out_small.shape == (8, 1)
    assert jnp.allclose(out_small, ref_small, atol=1e-5, rtol=1e-5), "mismatch (B=8)"

    # Exercise the multi-tile batch grid + padding path (2 even grid steps).
    x_mid = jax.random.normal(kx2, (1000, 2), dtype=jnp.float32)
    out_mid = jax.block_until_ready(shortnet_forward(x_mid, params))
    ref_mid = shortnet_reference(x_mid, params)
    assert out_mid.shape == (1000, 1)
    assert jnp.allclose(out_mid, ref_mid, atol=1e-5, rtol=1e-5), "mismatch (B=1000)"

    # Larger batch to exercise the evened-tile split and generation-aware VMEM.
    x_big = jax.random.normal(kx3, (20000, 2), dtype=jnp.float32)
    out_big = jax.block_until_ready(shortnet_forward(x_big, params))
    ref_big = shortnet_reference(x_big, params)
    assert out_big.shape == (20000, 1)
    assert jnp.allclose(out_big, ref_big, atol=1e-5, rtol=1e-5), "mismatch (B=20000)"

    print("KERNEL_OK")
</pallas_src>

<mosaic_0001>
module attributes {stable_mosaic.version = 11 : i64} {
  func.func @shortnet_kernel(%arg0: i32, %arg1: memref<2x128xf32, #tpu.memory_space<vmem>>, %arg2: memref<65x35xf32, #tpu.memory_space<vmem>>, %arg3: memref<1x128xf32, #tpu.memory_space<vmem>>) attributes {dimension_semantics = [#tpu.dimension_semantics<parallel>], iteration_bounds = array<i64: 1>, scalar_prefetch = 0 : i64, scratch_operands = 0 : i64, tpu.core_type = #tpu.core_type<tc>, window_params = [{transform_indices = @transform_0, window_bounds = array<i64: 2, 128>}, {pipeline_mode = #tpu.pipeline_mode<synchronous>, transform_indices = @transform_1, window_bounds = array<i64: 65, 35>}, {transform_indices = @transform_2, window_bounds = array<i64: 1, 128>}]} {
    %c0 = arith.constant 0 : index
    %c0_0 = arith.constant 0 : index
    %0 = vector.load %arg1[%c0, %c0_0] : memref<2x128xf32, #tpu.memory_space<vmem>>, vector<2x128xf32>
    %c0_1 = arith.constant 0 : index
    %c0_2 = arith.constant 0 : index
    %1 = vector.load %arg2[%c0_1, %c0_2] : memref<65x35xf32, #tpu.memory_space<vmem>>, vector<65x35xf32>
    %2 = vector.extract_strided_slice %1 {offsets = [0, 0], sizes = [32, 32], strides = [1, 1]} : vector<65x35xf32> to vector<32x32xf32>
    %3 = vector.extract_strided_slice %1 {offsets = [32, 0], sizes = [1, 32], strides = [1, 1]} : vector<65x35xf32> to vector<1x32xf32>
    %4 = vector.extract_strided_slice %1 {offsets = [33, 0], sizes = [1, 32], strides = [1, 1]} : vector<65x35xf32> to vector<1x32xf32>
    %5 = vector.extract_strided_slice %1 {offsets = [0, 32], sizes = [65, 2], strides = [1, 1]} : vector<65x35xf32> to vector<65x2xf32>
    %6 = vector.extract_strided_slice %1 {offsets = [0, 34], sizes = [65, 1], strides = [1, 1]} : vector<65x35xf32> to vector<65x1xf32>
    %cst = arith.constant dense<0.000000e+00> : vector<65x128xf32>
    %7 = tpu.matmul %5, %0, %cst {dimension_numbers = #tpu.dot_dimension_numbers<[1], [0], [0], [1], [0, 0, 1, 1], [], []>} : vector<65x2xf32>, vector<2x128xf32>, vector<65x128xf32> -> vector<65x128xf32>
    %8 = vector.broadcast %6 : vector<65x1xf32> to vector<65x128xf32>
    %9 = arith.addf %7, %8 : vector<65x128xf32>
    %10 = vector.extract_strided_slice %9 {offsets = [0, 0], sizes = [32, 128], strides = [1, 1]} : vector<65x128xf32> to vector<32x128xf32>
    %11 = math.tanh %10 : vector<32x128xf32>
    %cst_3 = arith.constant dense<0.000000e+00> : vector<32x128xf32>
    %12 = tpu.matmul %2, %11, %cst_3 {dimension_numbers = #tpu.dot_dimension_numbers<[1], [0], [0], [1], [0, 0, 1, 1], [], []>} : vector<32x32xf32>, vector<32x128xf32>, vector<32x128xf32> -> vector<32x128xf32>
    %13 = vector.extract_strided_slice %9 {offsets = [32, 0], sizes = [32, 128], strides = [1, 1]} : vector<65x128xf32> to vector<32x128xf32>
    %14 = arith.addf %12, %13 : vector<32x128xf32>
    %15 = math.tanh %14 : vector<32x128xf32>
    %cst_4 = arith.constant dense<0.000000e+00> : vector<1x128xf32>
    %16 = tpu.matmul %3, %15, %cst_4 {dimension_numbers = #tpu.dot_dimension_numbers<[1], [0], [0], [1], [0, 0, 1, 1], [], []>} : vector<1x32xf32>, vector<32x128xf32>, vector<1x128xf32> -> vector<1x128xf32>
    %cst_5 = arith.constant dense<0.000000e+00> : vector<1x128xf32>
    %17 = tpu.matmul %4, %11, %cst_5 {dimension_numbers = #tpu.dot_dimension_numbers<[1], [0], [0], [1], [0, 0, 1, 1], [], []>} : vector<1x32xf32>, vector<32x128xf32>, vector<1x128xf32> -> vector<1x128xf32>
    %18 = arith.addf %16, %17 : vector<1x128xf32>
    %19 = vector.extract_strided_slice %9 {offsets = [64, 0], sizes = [1, 128], strides = [1, 1]} : vector<65x128xf32> to vector<1x128xf32>
    %20 = arith.addf %18, %19 : vector<1x128xf32>
    %21 = arith.negf %20 : vector<1x128xf32>
    %22 = math.exp %21 : vector<1x128xf32>
    %cst_6 = arith.constant 1.000000e+00 : f32
    %23 = vector.broadcast %cst_6 : f32 to vector<1x128xf32>
    %24 = arith.addf %23, %22 : vector<1x128xf32>
    %25 = arith.divf %23, %24 : vector<1x128xf32>
    %c0_7 = arith.constant 0 : index
    %c0_8 = arith.constant 0 : index
    %26 = vector.load %arg3[%c0_7, %c0_8] : memref<1x128xf32, #tpu.memory_space<vmem>>, vector<1x128xf32>
    tpu.vector_store %arg3[%c0_7, %c0_8], %25 {strides = array<i32>} : memref<1x128xf32, #tpu.memory_space<vmem>>, vector<1x128xf32>,
    return
  }
  func.func @transform_0(%arg0: i32) -> (i32, i32) {
    %c0_i32 = arith.constant 0 : i32
    %c0_i32_0 = arith.constant 0 : i32
    return %c0_i32, %arg0 : i32, i32
  }
  func.func @transform_1(%arg0: i32) -> (i32, i32) {
    %c0_i32 = arith.constant 0 : i32
    %c0_i32_0 = arith.constant 0 : i32
    %c0_i32_1 = arith.constant 0 : i32
    return %c0_i32, %c0_i32_0 : i32, i32
  }
  func.func @transform_2(%arg0: i32) -> (i32, i32) {
    %c0_i32 = arith.constant 0 : i32
    %c0_i32_0 = arith.constant 0 : i32
    return %c0_i32, %arg0 : i32, i32
  }
}

</mosaic_0001>

<llo_original>
// kernel: shortnet_forward.1
$region0: #{shortnet_forward.1}
  #allocation0 [shape = 'u32[]', space=smem, size = 0x4, offset = 0x4, fixed_abs, tag = 'smem constant byte address 0x4 - core index']
  #allocation1 [shape = 'u32[72,128]{1,0:T(1,128)}', space=vmem, size = 0x9000, scoped, tag = 'internal scratch']
  %s0 = inlined_call_operand.vmem [shape: f32[2,128], index: 0, kind: input, shape index: {}]
  %s1 = inlined_call_operand.vmem [shape: f32[65,35], index: 1, kind: input, shape index: {}]
  %s2 = inlined_call_operand.vmem [shape: f32[1,128], index: 2, kind: output, shape index: {}]
  %s3 = sld [smem:[#allocation0]]
  $region18: #{shortnet_forward.1} parent=0
    _
  %s5 = ssub.s32 1, %s3
  %s6 = scalar_select 0, %s5, %s3
  // Predicated region
  $region2: #{shortnet_forward.1} parent=0 // pred_check
    _
  $region3: #{shortnet_forward.1} parent=0 // pred_check_branch
    %8 = sbr.rel (0) target = $region5
  $region4: #{shortnet_forward.1} parent=0 // pred_region
    _
  $region5: #{shortnet_forward.1} parent=0 // pred_fallthru
    _
  // Predicated region
  $region6: #{shortnet_forward.1} parent=0 // pred_check
    _
  $region7: #{shortnet_forward.1} parent=0 // pred_check_branch
    %10 = sbr.rel (0) target = $region9
  $region8: #{shortnet_forward.1} parent=0 // pred_region
    _
  $region9: #{shortnet_forward.1} parent=0 // pred_fallthru
    _
  %v11 = vld [vmem:[%s0] sm:$0x3]
  %v12 = vld [vmem:[%s1] sm:$0xff]
  %v13 = vld [vmem:[%s1 + $0x8] sm:$0xff]
  %v14 = vld [vmem:[%s1 + $0x10] sm:$0xff]
  %v15 = vld [vmem:[%s1 + $0x18] sm:$0xff]
  %v16 = vld [vmem:[%s1 + $0x20] sm:$0xff]
  %v17 = vld [vmem:[%s1 + $0x28] sm:$0xff]
  %v18 = vld [vmem:[%s1 + $0x30] sm:$0xff]
  %v19 = vld [vmem:[%s1 + $0x38] sm:$0xff]
  %v20 = vld [vmem:[%s1 + $0x40] sm:$0x1]
  %22 = vset.pattern.permute.xlu0 34
  %23 = vperm.xlu0 %22, %v12
  %v24 = vpop.permute.xlu0 %23
  %27 = vset.pattern.permute.xlu0 34
  %28 = vperm.xlu0 %27, %v13
  %v29 = vpop.permute.xlu0 %28
  %32 = vset.pattern.permute.xlu0 34
  %33 = vperm.xlu0 %32, %v14
  %v34 = vpop.permute.xlu0 %33
  %37 = vset.pattern.permute.xlu0 34
  %38 = vperm.xlu0 %37, %v15
  %v39 = vpop.permute.xlu0 %38
  %42 = vset.pattern.permute.xlu0 34
  %43 = vperm.xlu0 %42, %v16
  %v44 = vpop.permute.xlu0 %43
  %47 = vset.pattern.permute.xlu0 34
  %48 = vperm.xlu0 %47, %v17
  %v49 = vpop.permute.xlu0 %48
  %52 = vset.pattern.permute.xlu0 34
  %53 = vperm.xlu0 %52, %v18
  %v54 = vpop.permute.xlu0 %53
  %57 = vset.pattern.permute.xlu0 34
  %58 = vperm.xlu0 %57, %v19
  %v59 = vpop.permute.xlu0 %58
  %62 = vset.pattern.permute.xlu0 34
  %63 = vperm.xlu0 %62, %v20
  %v64 = vpop.permute.xlu0 %63
  %66 = vrot.lane.b32.xlu0 %v12, 96
  %v67 = vpop.permute.xlu0 %66
  %68 = vrot.lane.b32.xlu0 %v13, 96
  %v69 = vpop.permute.xlu0 %68
  %70 = vrot.lane.b32.xlu0 %v14, 96
  %v71 = vpop.permute.xlu0 %70
  %72 = vrot.lane.b32.xlu0 %v15, 96
  %v73 = vpop.permute.xlu0 %72
  %74 = vrot.lane.b32.xlu0 %v16, 96
  %v75 = vpop.permute.xlu0 %74
  %76 = vrot.lane.b32.xlu0 %v17, 96
  %v77 = vpop.permute.xlu0 %76
  %78 = vrot.lane.b32.xlu0 %v18, 96
  %v79 = vpop.permute.xlu0 %78
  %80 = vrot.lane.b32.xlu0 %v19, 96
  %v81 = vpop.permute.xlu0 %80
  %82 = vrot.lane.b32.xlu0 %v20, 96
  %v83 = vpop.permute.xlu0 %82
  %vm84 = vcmask 15360
  %v85 = vsel %vm84, %v67, 0
  %v87 = vsel %vm84, %v69, 0
  %v89 = vsel %vm84, %v71, 0
  %v91 = vsel %vm84, %v73, 0
  %v93 = vsel %vm84, %v75, 0
  %v95 = vsel %vm84, %v77, 0
  %v97 = vsel %vm84, %v79, 0
  %v99 = vsel %vm84, %v81, 0
  %v101 = vsel %vm84, %v83, 0
  %vm103 = vcmask 1041408
  %v105 = vsel %vm103, %v11, 0
  %107 = vmatpush.msra.mxu0 0.0
  %108 = vmatpush.msra.mxu0 0.0
  %109 = vmatpush.msra.mxu0 0.0
  %110 = vmatpush.msra.mxu0 0.0
  %111 = vmatpush.msra.mxu0 0.0
  %112 = vmatpush.msra.mxu0 0.0
  %113 = vmatpush.msra.mxu0 0.0
  %114 = vmatpush.msra.mxu0 0.0
  %115 = vmatpush.msra.mxu0 0.0
  %116 = vmatpush.msra.mxu0 0.0
  %117 = vmatpush.msra.mxu0 0.0
  %118 = vmatpush.msra.mxu0 0.0
  %119 = vmatpush.msra.mxu0 0.0
  %120 = vmatpush.msra.mxu0 0.0
  %121 = vmatpush.msra.mxu0 0.0
  %122 = vmatpush.msra.mxu0 %v105
  %123 = vmatmul.f32.gmra.mxu0 %v85
  %v124 = vpop.f32.mrf.mxu0
  %v125 = vadd.f32 %v24, %v124
  %126 = vmatmul.f32.gmra.mxu0 %v87
  %v127 = vpop.f32.mrf.mxu0
  %v128 = vadd.f32 %v29, %v127
  %129 = vmatmul.f32.gmra.mxu0 %v89
  %v130 = vpop.f32.mrf.mxu0
  %v131 = vadd.f32 %v34, %v130
  %132 = vmatmul.f32.gmra.mxu0 %v91
  %v133 = vpop.f32.mrf.mxu0
  %v134 = vadd.f32 %v39, %v133
  %135 = vmatmul.f32.gmra.mxu0 %v93
  %v136 = vpop.f32.mrf.mxu0
  %v137 = vadd.f32 %v44, %v136
  %138 = vmatmul.f32.gmra.mxu0 %v95
  %v139 = vpop.f32.mrf.mxu0
  %v140 = vadd.f32 %v49, %v139
  %141 = vmatmul.f32.gmra.mxu0 %v97
  %v142 = vpop.f32.mrf.mxu0
  %v143 = vadd.f32 %v54, %v142
  %144 = vmatmul.f32.gmra.mxu0 %v99
  %v145 = vpop.f32.mrf.mxu0
  %v146 = vadd.f32 %v59, %v145
  %147 = vmatmul.f32.gmra.mxu0 %v101
  %v148 = vpop.f32.mrf.mxu0
  %v149 = vadd.f32 %v64, %v148
  %150 = vdwg.mxu0
  %v151 = vtanh.pop %v125
  %v152 = vtanh.pop %v128
  %v153 = vtanh.pop %v131
  %v154 = vtanh.pop %v134
  %vm155 = vcmask 261120
  %v156 = vsel %vm155, %v12, 0
  %v158 = vsel %vm155, %v13, 0
  %v160 = vsel %vm155, %v14, 0
  %v162 = vsel %vm155, %v15, 0
  %164 = vmatpush.msra.mxu0 0.0
  %165 = vmatpush.msra.mxu0 0.0
  %166 = vmatpush.msra.mxu0 0.0
  %167 = vmatpush.msra.mxu0 0.0
  %168 = vmatpush.msra.mxu0 0.0
  %169 = vmatpush.msra.mxu0 0.0
  %170 = vmatpush.msra.mxu0 0.0
  %171 = vmatpush.msra.mxu0 0.0
  %172 = vmatpush.msra.mxu0 0.0
  %173 = vmatpush.msra.mxu0 0.0
  %174 = vmatpush.msra.mxu0 0.0
  %175 = vmatpush.msra.mxu0 0.0
  %176 = vmatpush.msra.mxu0 %v154
  %177 = vmatpush.msra.mxu0 %v153
  %178 = vmatpush.msra.mxu0 %v152
  %179 = vmatpush.msra.mxu0 %v151
  %180 = vmatmul.f32.gmra.mxu0 %v156
  %v181 = vpop.f32.mrf.mxu0
  %v182 = vadd.f32 %v137, %v181
  %183 = vmatmul.f32.gmra.mxu0 %v158
  %v184 = vpop.f32.mrf.mxu0
  %v185 = vadd.f32 %v140, %v184
  %186 = vmatmul.f32.gmra.mxu0 %v160
  %v187 = vpop.f32.mrf.mxu0
  %v188 = vadd.f32 %v143, %v187
  %189 = vmatmul.f32.gmra.mxu0 %v162
  %v190 = vpop.f32.mrf.mxu0
  %v191 = vadd.f32 %v146, %v190
  %192 = vdwg.mxu0
  %v193 = vtanh.pop %v182
  %v194 = vtanh.pop %v185
  %v195 = vtanh.pop %v188
  %v196 = vtanh.pop %v191
  %v197 = vrot.slane %v16, 1
  %v198 = vsel %vm155, %v197, 0
  %200 = vmatpush.msra.mxu0 0.0
  %201 = vmatpush.msra.mxu0 0.0
  %202 = vmatpush.msra.mxu0 0.0
  %203 = vmatpush.msra.mxu0 0.0
  %204 = vmatpush.msra.mxu0 0.0
  %205 = vmatpush.msra.mxu0 0.0
  %206 = vmatpush.msra.mxu0 0.0
  %207 = vmatpush.msra.mxu0 0.0
  %208 = vmatpush.msra.mxu0 0.0
  %209 = vmatpush.msra.mxu0 0.0
  %210 = vmatpush.msra.mxu0 0.0
  %211 = vmatpush.msra.mxu0 0.0
  %212 = vmatpush.msra.mxu0 %v154
  %213 = vmatpush.msra.mxu0 %v153
  %214 = vmatpush.msra.mxu0 %v152
  %215 = vmatpush.msra.mxu0 %v151
  %216 = vmatmul.f32.gmra.mxu0 %v198
  %v217 = vpop.f32.mrf.mxu0
  %v218 = vadd.f32 0.0, %v217
  %219 = vdwg.mxu0
  %v220 = vsel %vm155, %v16, 0
  %222 = vmatpush.msra.mxu0 0.0
  %223 = vmatpush.msra.mxu0 0.0
  %224 = vmatpush.msra.mxu0 0.0
  %225 = vmatpush.msra.mxu0 0.0
  %226 = vmatpush.msra.mxu0 0.0
  %227 = vmatpush.msra.mxu0 0.0
  %228 = vmatpush.msra.mxu0 0.0
  %229 = vmatpush.msra.mxu0 0.0
  %230 = vmatpush.msra.mxu0 0.0
  %231 = vmatpush.msra.mxu0 0.0
  %232 = vmatpush.msra.mxu0 0.0
  %233 = vmatpush.msra.mxu0 0.0
  %234 = vmatpush.msra.mxu0 %v196
  %235 = vmatpush.msra.mxu0 %v195
  %236 = vmatpush.msra.mxu0 %v194
  %237 = vmatpush.msra.mxu0 %v193
  %238 = vmatmul.f32.gmra.mxu0 %v220
  %v239 = vpop.f32.mrf.mxu0
  %v240 = vadd.f32 %v218, %v239
  %241 = vdwg.mxu0
  %v242 = vadd.f32 %v240, %v149
  %v243 = vxor.u32 %v242, 2147483648
  %v244 = vmul.f32 %v243, 1.442695
  %v245 = vpow.pop %v244
  %v246 = vadd.f32 %v245, 1.0
  %v247 = vrcp.pop %v246
  %v248 = vmul.f32 %v246, %v247
  %v249 = vsub.f32 1.0, %v248
  %v250 = vmul.f32 %v247, %v249
  %v251 = vadd.f32 %v247, %v250
  %vm252 = vweird.f32 %v246
  %vm253 = vweird.f32 %v247
  %vm254 = vmor %vm252, %vm253
  %v255 = vsel %vm254, %v247, %v251
  %v256 = vand.u32 2147483647, %v246
  %vm257 = vcmp.eq.f32.partialorder %v256, 8.507059e+37
  %v258 = vand.u32 %v246, 2147483648
  %v259 = vor.u32 1.1754944e-38, %v258
  %v260 = vsel %vm257, %v259, %v255
  %v261 = vmul.f32 1.0, %v260
  %262 = vst [vmem:[%s2] sm:$0x1] %v261
  // Predicated region
  $region10: #{shortnet_forward.1} parent=0 // pred_check
    _
  $region11: #{shortnet_forward.1} parent=0 // pred_check_branch
    %264 = sbr.rel (0) target = $region13
  $region12: #{shortnet_forward.1} parent=0 // pred_region
    _
  $region13: #{shortnet_forward.1} parent=0 // pred_fallthru
    _
  // Predicated region
  $region14: #{shortnet_forward.1} parent=0 // pred_check
    _
  $region15: #{shortnet_forward.1} parent=0 // pred_check_branch
    %266 = sbr.rel (0) target = $region17
  $region16: #{shortnet_forward.1} parent=0 // pred_region
    _
  $region17: #{shortnet_forward.1} parent=0 // pred_fallthru
    _

</llo_original>
